<compile_context>
chip_gen: v7x
topology: tpu7x:2x2x1
jax: 0.10.0
libtpu: 0.0.40
codegen_flags: <defaults>
</compile_context>

<pallas_src>
import functools

import jax
import jax.numpy as jnp
from jax.experimental import pallas as pl
from jax.experimental.pallas import tpu as pltpu


def _gemm_bn_relu_kernel(p_ref, w_ref, sb_ref, o_ref):
    """Single-K-step tile: relu((patches @ w) * scale + bias).

    p_ref:  (tm, Kp)  bf16 im2col patches strip (full contraction)
    w_ref:  (Kp, tn)  bf16 weight panel (grid-constant when tn == Cp)
    sb_ref: (2, tn)   f32 folded-BN scale (row 0) / bias (row 1)
    o_ref:  (tm, tn)  output tile (lane-dense, written once)
    """
    acc = jnp.dot(p_ref[...], w_ref[...], preferred_element_type=jnp.float32)
    y = acc * sb_ref[0] + sb_ref[1]
    o_ref[...] = jnp.maximum(y, 0.0).astype(o_ref.dtype)


def _gemm_bn_relu_acc_kernel(p_ref, w_ref, sb_ref, o_ref, acc_ref):
    """Tiled-reduction variant for large K (K > 4096): f32 VMEM accumulator."""
    k = pl.program_id(2)

    @pl.when(k == 0)
    def _init():
        acc_ref[...] = jnp.zeros_like(acc_ref)

    acc_ref[...] += jnp.dot(p_ref[...], w_ref[...],
                            preferred_element_type=jnp.float32)

    @pl.when(k == pl.num_programs(2) - 1)
    def _finalize():
        y = acc_ref[...] * sb_ref[0] + sb_ref[1]
        o_ref[...] = jnp.maximum(y, 0.0).astype(o_ref.dtype)


def _round_up(x, m):
    return (x + m - 1) // m * m


def _select_tiling(M, K, Cout):
    """Pick GEMM padding + tile sizes (all static Python ints)."""
    Cp = _round_up(Cout, 128)

    # Contraction: one MXU step when the whole K fits comfortably; pad K only
    # to the bf16 sublane pack (16), not 128, so small-Cin layers don't waste
    # HBM reads / MXU cycles on zero columns.
    if K <= 4096:
        tk = Kp = _round_up(K, 16)
        single_k = True
    else:
        tk = 512
        Kp = _round_up(K, tk)
        single_k = False

    # Cout tile: full padded Cout when the bf16 weight panel is small so its
    # block index is constant across the grid (weights VMEM-resident, DMAed
    # once); otherwise 256-wide tiles (fills v6e/v7x's 2x256x256 MXU).
    if Cp * Kp * 2 <= 4 * 1024 * 1024 and Cp <= 1024:
        tn = Cp
    else:
        tn = min(256, Cp)

    # M strip: big, but keep at least 2 parallel grid iterations when possible
    # so v7x's two TensorCores both get work.
    tm = min(512, _round_up(M, 128))
    while tm > 128 and (_round_up(M, tm) // tm) * (Cp // tn) < 2:
        tm //= 2
    Mp = _round_up(M, tm)
    return Mp, Kp, Cp, tm, tk, tn, single_k


@functools.partial(jax.jit, static_argnames=("with_bn", "stride", "padding"))
def basic_conv2d(x_nchw, weight_oihw, bn_gamma, bn_beta, bn_mean, bn_var,
                 *, with_bn=True, eps=1e-5, stride=1, padding=1):
    """Forward of BasicConv2d. x_nchw: (N, Cin, H, W) float32; NCHW in/out."""
    N, Cin, H, W = x_nchw.shape
    Cout, _, KH, KW = weight_oihw.shape
    Ho = (H + 2 * padding - KH) // stride + 1
    Wo = (W + 2 * padding - KW) // stride + 1

    # ---- wrapper-side layout plumbing: NHWC, bf16 cast, pad, im2col ---------
    x = jnp.transpose(x_nchw, (0, 2, 3, 1)).astype(jnp.bfloat16)      # NHWC
    x_pad = jnp.pad(
        x, ((0, 0), (padding, padding), (padding, padding), (0, 0)))
    cols = []
    for kh in range(KH):
        for kw in range(KW):
            cols.append(
                x_pad[:, kh:kh + stride * Ho:stride,
                      kw:kw + stride * Wo:stride, :])                 # (N,Ho,Wo,Cin)
    K = KH * KW * Cin
    M = N * Ho * Wo
    patches = jnp.concatenate(cols, axis=-1).reshape(M, K)

    # Weight -> (KH*KW*Cin, Cout) matching the (kh, kw, cin) ordering above.
    w = jnp.transpose(weight_oihw, (2, 3, 1, 0)).reshape(K, Cout)
    w = w.astype(jnp.bfloat16)

    # Folded BatchNorm (eval mode) -> fused (2, Cout) scale/bias block.
    if with_bn:
        scale = bn_gamma / jnp.sqrt(bn_var + eps)
        bias = bn_beta - bn_mean * scale
    else:
        scale = jnp.ones((Cout,), jnp.float32)
        bias = jnp.zeros((Cout,), jnp.float32)
    sb = jnp.stack([scale, bias]).astype(jnp.float32)                 # (2, Cout)

    # Static tiling + zero-padding (padded zeros contribute nothing).
    Mp, Kp, Cp, tm, tk, tn, single_k = _select_tiling(M, K, Cout)
    patches = jnp.pad(patches, ((0, Mp - M), (0, Kp - K)))
    w = jnp.pad(w, ((0, Kp - K), (0, Cp - Cout)))
    sb = jnp.pad(sb, ((0, 0), (0, Cp - Cout)))

    out_dtype = x_nchw.dtype
    cost = pl.CostEstimate(
        flops=2 * M * K * Cout,
        transcendentals=0,
        bytes_accessed=(Mp * Kp * 2 + Kp * Cp * 2
                        + Mp * Cp * jnp.dtype(out_dtype).itemsize))

    if single_k:
        out = pl.pallas_call(
            _gemm_bn_relu_kernel,
            out_shape=jax.ShapeDtypeStruct((Mp, Cp), out_dtype),
            grid_spec=pltpu.PrefetchScalarGridSpec(
                num_scalar_prefetch=0,
                grid=(Mp // tm, Cp // tn),
                in_specs=[
                    pl.BlockSpec((tm, Kp), lambda i, j: (i, 0)),   # patches
                    pl.BlockSpec((Kp, tn), lambda i, j: (0, j)),   # weights
                    pl.BlockSpec((2, tn), lambda i, j: (0, j)),    # fused BN
                ],
                out_specs=pl.BlockSpec((tm, tn), lambda i, j: (i, j)),
            ),
            compiler_params=pltpu.CompilerParams(
                dimension_semantics=("parallel", "parallel"),
                vmem_limit_bytes=48 * 1024 * 1024),
            cost_estimate=cost,
        )(patches, w, sb)
    else:
        out = pl.pallas_call(
            _gemm_bn_relu_acc_kernel,
            out_shape=jax.ShapeDtypeStruct((Mp, Cp), out_dtype),
            grid_spec=pltpu.PrefetchScalarGridSpec(
                num_scalar_prefetch=0,
                grid=(Mp // tm, Cp // tn, Kp // tk),   # reduction axis last
                in_specs=[
                    pl.BlockSpec((tm, tk), lambda i, j, k: (i, k)),   # patches
                    pl.BlockSpec((tk, tn), lambda i, j, k: (k, j)),   # weights
                    pl.BlockSpec((2, tn), lambda i, j, k: (0, j)),    # fused BN
                ],
                out_specs=pl.BlockSpec((tm, tn), lambda i, j, k: (i, j)),
                scratch_shapes=[pltpu.VMEM((tm, tn), jnp.float32)],
            ),
            compiler_params=pltpu.CompilerParams(
                dimension_semantics=("parallel", "parallel", "arbitrary"),
                vmem_limit_bytes=48 * 1024 * 1024),
            cost_estimate=cost,
        )(patches, w, sb)

    out = out[:M, :Cout].reshape(N, Ho, Wo, Cout)
    return jnp.transpose(out, (0, 3, 1, 2))                           # NCHW


def _reference(x_nchw, weight_oihw, bn_gamma, bn_beta, bn_mean, bn_var,
               *, with_bn=True, eps=1e-5, stride=1, padding=1):
    y = jax.lax.conv_general_dilated(
        x_nchw, weight_oihw, window_strides=(stride, stride),
        padding=[(padding, padding), (padding, padding)],
        dimension_numbers=("NCHW", "OIHW", "NCHW"))
    if with_bn:
        s = bn_gamma / jnp.sqrt(bn_var + eps)
        b = bn_beta - bn_mean * s
        y = y * s.reshape(1, -1, 1, 1) + b.reshape(1, -1, 1, 1)
    return jnp.maximum(y, 0.0)


if __name__ == "__main__":
    key = jax.random.PRNGKey(0)
    k_x, k_w, k_g, k_b, k_m, k_v = jax.random.split(key, 6)

    N, Cin, H, W = 2, 4, 16, 16
    Cout, KH, KW = 8, 3, 3

    x = jax.random.normal(k_x, (N, Cin, H, W), dtype=jnp.float32)
    weight = jax.random.normal(k_w, (Cout, Cin, KH, KW), dtype=jnp.float32) * 0.1
    gamma = jax.random.normal(k_g, (Cout,), dtype=jnp.float32) * 0.1 + 1.0
    beta = jax.random.normal(k_b, (Cout,), dtype=jnp.float32) * 0.1
    mean = jax.random.normal(k_m, (Cout,), dtype=jnp.float32) * 0.1
    var = jax.random.uniform(k_v, (Cout,), dtype=jnp.float32,
                             minval=0.5, maxval=1.5)

    for with_bn in (True, False):
        out = basic_conv2d(x, weight, gamma, beta, mean, var, with_bn=with_bn)
        out = jax.block_until_ready(out)
        ref = _reference(x, weight, gamma, beta, mean, var, with_bn=with_bn)
        assert out.shape == (N, Cout, H, W)
        # bf16 MXU operands (f32 accumulation) -> loosened tolerance vs f32 ref.
        max_err = float(jnp.max(jnp.abs(out - ref)))
        assert jnp.allclose(out, ref, atol=2e-2, rtol=2e-2), (
            f"mismatch vs reference (with_bn={with_bn}, max abs err={max_err})")

    print("KERNEL_OK")
</pallas_src>

<mosaic_0001>
module attributes {stable_mosaic.version = 11 : i64} {
  func.func @_gemm_bn_relu_kernel(%arg0: i32, %arg1: i32, %arg2: memref<256x48xbf16, #tpu.memory_space<vmem>>, %arg3: memref<48x128xbf16, #tpu.memory_space<vmem>>, %arg4: memref<2x128xf32, #tpu.memory_space<vmem>>, %arg5: memref<256x128xf32, #tpu.memory_space<vmem>>) attributes {dimension_semantics = [#tpu.dimension_semantics<parallel>, #tpu.dimension_semantics<parallel>], iteration_bounds = array<i64: 2, 1>, scalar_prefetch = 0 : i64, scratch_operands = 0 : i64, tpu.core_type = #tpu.core_type<tc>, window_params = [{transform_indices = @transform_0, window_bounds = array<i64: 256, 48>}, {transform_indices = @transform_1, window_bounds = array<i64: 48, 128>}, {transform_indices = @transform_2, window_bounds = array<i64: 2, 128>}, {transform_indices = @transform_3, window_bounds = array<i64: 256, 128>}]} {
    %c0 = arith.constant 0 : index
    %c0_0 = arith.constant 0 : index
    %0 = vector.load %arg2[%c0, %c0_0] : memref<256x48xbf16, #tpu.memory_space<vmem>>, vector<256x48xbf16>
    %c0_1 = arith.constant 0 : index
    %c0_2 = arith.constant 0 : index
    %1 = vector.load %arg3[%c0_1, %c0_2] : memref<48x128xbf16, #tpu.memory_space<vmem>>, vector<48x128xbf16>
    %cst = arith.constant dense<0.000000e+00> : vector<256x128xf32>
    %2 = tpu.matmul %0, %1, %cst {dimension_numbers = #tpu.dot_dimension_numbers<[1], [0], [0], [1], [0, 0, 1, 1], [], []>} : vector<256x48xbf16>, vector<48x128xbf16>, vector<256x128xf32> -> vector<256x128xf32>
    %c0_3 = arith.constant 0 : index
    %c0_4 = arith.constant 0 : index
    %3 = vector.load %arg4[%c0_3, %c0_4] : memref<2x128xf32, #tpu.memory_space<vmem>>, vector<1x128xf32>
    %4 = vector.shape_cast %3 : vector<1x128xf32> to vector<128xf32>
    %5 = vector.shape_cast %4 : vector<128xf32> to vector<1x128xf32>
    %6 = vector.broadcast %5 : vector<1x128xf32> to vector<256x128xf32>
    %7 = arith.mulf %2, %6 : vector<256x128xf32>
    %c1 = arith.constant 1 : index
    %c0_5 = arith.constant 0 : index
    %8 = vector.load %arg4[%c1, %c0_5] : memref<2x128xf32, #tpu.memory_space<vmem>>, vector<1x128xf32>
    %9 = vector.shape_cast %8 : vector<1x128xf32> to vector<128xf32>
    %10 = vector.shape_cast %9 : vector<128xf32> to vector<1x128xf32>
    %11 = vector.broadcast %10 : vector<1x128xf32> to vector<256x128xf32>
    %12 = arith.addf %7, %11 : vector<256x128xf32>
    %cst_6 = arith.constant 0.000000e+00 : f32
    %13 = vector.broadcast %cst_6 : f32 to vector<256x128xf32>
    %14 = arith.maximumf %12, %13 : vector<256x128xf32>
    %c0_7 = arith.constant 0 : index
    %c0_8 = arith.constant 0 : index
    %15 = vector.load %arg5[%c0_7, %c0_8] : memref<256x128xf32, #tpu.memory_space<vmem>>, vector<256x128xf32>
    tpu.vector_store %arg5[%c0_7, %c0_8], %14 {strides = array<i32>} : memref<256x128xf32, #tpu.memory_space<vmem>>, vector<256x128xf32>,
    return
  }
  func.func @transform_0(%arg0: i32, %arg1: i32) -> (i32, i32) {
    %c0_i32 = arith.constant 0 : i32
    %c0_i32_0 = arith.constant 0 : i32
    return %arg0, %c0_i32 : i32, i32
  }
  func.func @transform_1(%arg0: i32, %arg1: i32) -> (i32, i32) {
    %c0_i32 = arith.constant 0 : i32
    %c0_i32_0 = arith.constant 0 : i32
    return %c0_i32, %arg1 : i32, i32
  }
  func.func @transform_2(%arg0: i32, %arg1: i32) -> (i32, i32) {
    %c0_i32 = arith.constant 0 : i32
    %c0_i32_0 = arith.constant 0 : i32
    return %c0_i32, %arg1 : i32, i32
  }
  func.func @transform_3(%arg0: i32, %arg1: i32) -> (i32, i32) {
    %c0_i32 = arith.constant 0 : i32
    return %arg0, %arg1 : i32, i32
  }
}

</mosaic_0001>

<llo_original>
// kernel: basic_conv2d.1
$region0: #{basic_conv2d.1}
  #allocation0 [shape = 'u32[]', space=smem, size = 0x4, offset = 0x4, fixed_abs, tag = 'smem constant byte address 0x4 - core index']
  #allocation1 [shape = 'u32[144,128]{1,0:T(1,128)}', space=vmem, size = 0x12000, scoped, tag = 'internal scratch']
  %s0 = inlined_call_operand.vmem [shape: bf16[512,48], index: 0, kind: input, shape index: {}]
  %s1 = inlined_call_operand.vmem [shape: bf16[48,128], index: 1, kind: input, shape index: {}]
  %s2 = inlined_call_operand.vmem [shape: f32[2,128], index: 2, kind: input, shape index: {}]
  %s3 = inlined_call_operand.vmem [shape: f32[512,128], index: 3, kind: output, shape index: {}]
  %s4 = sld [smem:[#allocation0]]
  $region45: #{basic_conv2d.1} parent=0
    _
  %s6 = ssub.s32 1, %s4
  %s7 = scalar_select 0, %s6, %s4
  loop: start=0, step=1, limit=4
  $region2: #{basic_conv2d.1} parent=0 // loop_pre_header
    _
  $region3: #{basic_conv2d.1} parent=0 // loop_header
    %s9 = sphi 0, %s13
    %p10 = scmp.ge.s32.totalorder %s9, 4
    %s16 = sphi 0, %s28
    %s17 = sphi 0, %s24
    %s18 = sphi 0, %s16
    %s19 = sphi 0, %s17
    %s20 = sphi 0, %s18
    %s21 = sphi 0, %s19
    %s31 = sphi 0, %s33
    %s34 = sphi 0, %s31
    %s35 = sphi 0, %s34
    %s51 = sphi 0, %s35
    %s57 = sphi 0, %s59
    %s60 = sphi 0, %s57
    %s61 = sphi 0, %s60
    %s77 = sphi 0, %s61
    %s83 = sphi 0, %s85
    %s86 = sphi 0, %s83
    %s87 = sphi 0, %s86
    %s103 = sphi 0, %s87
    %s111 = sphi 0, %s113
    %s114 = sphi 0, %s111
    %s115 = sphi 0, %s114
    %s131 = sphi 0, %s115
  $region4: #{basic_conv2d.1} parent=0 // loop_header_branch
    %12 = sbr.rel (%p10) target = $region8
  $region5: #{basic_conv2d.1} parent=0 // loop_body
    %s14 = ssub.s32 %s9, 1
    %s15 = ssub.s32 %s9, 2
    %s22 = sadd.s32 1, %s17
    %p23 = scmp.ge.s32.totalorder %s22, 1
    %s24 = scalar_select %p23, 0, %s22
    %s25 = sadd.s32 1, %s16
    %s26 = scalar_select %p23, %s25, %s16
    %p27 = scmp.ge.s32.totalorder %s26, 2
    %s28 = scalar_select %p27, 0, %s26
    %s29 = ssub.s32 %s16, %s28
    %p30 = scmp.eq.s32.totalorder %s29, 0
    %s32 = sadd.s32 %s31, 1
    %s33 = scalar_select %p30, %s31, %s32
    %p36 = pneg %p30
    %p37 = scmp.eq.s32.totalorder %s9, 1
    %p38 = por %p36, %p37
    %p39 = scmp.ne.s32.totalorder %s31, %s34
    %p40 = scmp.eq.s32.totalorder %s9, 0
    %p41 = por %p39, %p40
    %p42 = scmp.ne.s32.totalorder %s31, %s34
    %p43 = scmp.eq.s32.totalorder %s14, 1
    %p44 = por %p42, %p43
    %p45 = scmp.ne.s32.totalorder %s34, %s35
    %p46 = scmp.eq.s32.totalorder %s14, 0
    %p47 = por %p45, %p46
    %p48 = scmp.ne.s32.totalorder %s34, %s35
    %p49 = scmp.eq.s32.totalorder %s15, 1
    %p50 = por %p48, %p49
    %p52 = scmp.ne.s32.totalorder %s35, %s51
    %p53 = scmp.eq.s32.totalorder %s15, 0
    %p54 = por %p52, %p53
    %s55 = ssub.s32 %s17, %s24
    %p56 = scmp.eq.s32.totalorder %s55, 0
    %s58 = sadd.s32 %s57, 1
    %s59 = scalar_select %p56, %s57, %s58
    %p62 = pneg %p56
    %p63 = scmp.eq.s32.totalorder %s9, 1
    %p64 = por %p62, %p63
    %p65 = scmp.ne.s32.totalorder %s57, %s60
    %p66 = scmp.eq.s32.totalorder %s9, 0
    %p67 = por %p65, %p66
    %p68 = scmp.ne.s32.totalorder %s57, %s60
    %p69 = scmp.eq.s32.totalorder %s14, 1
    %p70 = por %p68, %p69
    %p71 = scmp.ne.s32.totalorder %s60, %s61
    %p72 = scmp.eq.s32.totalorder %s14, 0
    %p73 = por %p71, %p72
    %p74 = scmp.ne.s32.totalorder %s60, %s61
    %p75 = scmp.eq.s32.totalorder %s15, 1
    %p76 = por %p74, %p75
    %p78 = scmp.ne.s32.totalorder %s61, %s77
    %p79 = scmp.eq.s32.totalorder %s15, 0
    %p80 = por %p78, %p79
    %s81 = ssub.s32 %s17, %s24
    %p82 = scmp.eq.s32.totalorder %s81, 0
    %s84 = sadd.s32 %s83, 1
    %s85 = scalar_select %p82, %s83, %s84
    %p88 = pneg %p82
    %p89 = scmp.eq.s32.totalorder %s9, 1
    %p90 = por %p88, %p89
    %p91 = scmp.ne.s32.totalorder %s83, %s86
    %p92 = scmp.eq.s32.totalorder %s9, 0
    %p93 = por %p91, %p92
    %p94 = scmp.ne.s32.totalorder %s83, %s86
    %p95 = scmp.eq.s32.totalorder %s14, 1
    %p96 = por %p94, %p95
    %p97 = scmp.ne.s32.totalorder %s86, %s87
    %p98 = scmp.eq.s32.totalorder %s14, 0
    %p99 = por %p97, %p98
    %p100 = scmp.ne.s32.totalorder %s86, %s87
    %p101 = scmp.eq.s32.totalorder %s15, 1
    %p102 = por %p100, %p101
    %p104 = scmp.ne.s32.totalorder %s87, %s103
    %p105 = scmp.eq.s32.totalorder %s15, 0
    %p106 = por %p104, %p105
    %s107 = ssub.s32 %s16, %s28
    %s108 = ssub.s32 %s17, %s24
    %s109 = sor.u32 %s107, %s108
    %p110 = scmp.eq.s32.totalorder %s109, 0
    %s112 = sadd.s32 %s111, 1
    %s113 = scalar_select %p110, %s111, %s112
    %p116 = pneg %p110
    %p117 = scmp.eq.s32.totalorder %s9, 1
    %p118 = por %p116, %p117
    %p119 = scmp.ne.s32.totalorder %s111, %s114
    %p120 = scmp.eq.s32.totalorder %s9, 0
    %p121 = por %p119, %p120
    %p122 = scmp.ne.s32.totalorder %s111, %s114
    %p123 = scmp.eq.s32.totalorder %s14, 1
    %p124 = por %p122, %p123
    %p125 = scmp.ne.s32.totalorder %s114, %s115
    %p126 = scmp.eq.s32.totalorder %s14, 0
    %p127 = por %p125, %p126
    %p128 = scmp.ne.s32.totalorder %s114, %s115
    %p129 = scmp.eq.s32.totalorder %s15, 1
    %p130 = por %p128, %p129
    %p132 = scmp.ne.s32.totalorder %s115, %s131
    %p133 = scmp.eq.s32.totalorder %s15, 0
    %p134 = por %p132, %p133
    %p135 = scmp.le.s32.totalorder 1, %s9
    %p136 = scmp.lt.s32.totalorder %s9, 3
    %p137 = pnand %p135, %p136
    %p138 = pneg %p137
    // Predicated region
    $region9: #{basic_conv2d.1} parent=5 // pred_check
      _
    $region10: #{basic_conv2d.1} parent=5 // pred_check_branch
      %140 = sbr.rel (%p137) target = $region12
    $region11: #{basic_conv2d.1} parent=5 // pred_region
      %s141 = ssub.s32 %s9, 1
      // Predicated region
      $region13: #{basic_conv2d.1} parent=11 // pred_check
        %p142 = pneg %p73
      $region14: #{basic_conv2d.1} parent=11 // pred_check_branch
        %144 = sbr.rel (%p142) target = $region16
      $region15: #{basic_conv2d.1} parent=11 // pred_region
        %p145 = scmp.lt.s32.totalorder %s19, 0
        %s146 = scalar_select %p145, %s19, 0
        %s147 = smul.addr %s146, 4
        %s148 = scalar_lea.vmem %s1, %s147
      $region16: #{basic_conv2d.1} parent=11 // pred_fallthru
        _
      // Predicated region
      $region17: #{basic_conv2d.1} parent=11 // pred_check
        %p149 = pneg %p99
      $region18: #{basic_conv2d.1} parent=11 // pred_check_branch
        %151 = sbr.rel (%p149) target = $region20
      $region19: #{basic_conv2d.1} parent=11 // pred_region
        %p152 = scmp.lt.s32.totalorder %s19, 0
        %s153 = scalar_select %p152, %s19, 0
        %s154 = smul.addr %s153, 2
        %s155 = scalar_lea.vmem %s2, %s154
      $region20: #{basic_conv2d.1} parent=11 // pred_fallthru
        _
    $region12: #{basic_conv2d.1} parent=5 // pred_fallthru
      _
    %p156 = scmp.lt.s32.totalorder %s9, 2
    // Predicated region
    $region21: #{basic_conv2d.1} parent=5 // pred_check
      %p157 = pneg %p156
    $region22: #{basic_conv2d.1} parent=5 // pred_check_branch
      %159 = sbr.rel (%p157) target = $region24
    $region23: #{basic_conv2d.1} parent=5 // pred_region
      // Predicated region
      $region25: #{basic_conv2d.1} parent=23 // pred_check
        %p160 = pneg %p41
      $region26: #{basic_conv2d.1} parent=23 // pred_check_branch
        %162 = sbr.rel (%p160) target = $region28
      $region27: #{basic_conv2d.1} parent=23 // pred_region
        %s163 = smul.u32 32, %s16
        %p164 = scmp.lt.s32.totalorder %s163, 63
        %s165 = scalar_select %p164, %s163, 63
        %s166 = smul.addr %s165, 4
        %s167 = scalar_lea.vmem %s0, %s166
        %s168 = smul.u32 32, %s16
      $region28: #{basic_conv2d.1} parent=23 // pred_fallthru
        _
    $region24: #{basic_conv2d.1} parent=5 // pred_fallthru
      _
    %p169 = scmp.le.s32.totalorder 1, %s9
    %p170 = scmp.lt.s32.totalorder %s9, 3
    %p171 = pnand %p169, %p170
    %p172 = pneg %p171
    // Predicated region
    $region29: #{basic_conv2d.1} parent=5 // pred_check
      _
    $region30: #{basic_conv2d.1} parent=5 // pred_check_branch
      %174 = sbr.rel (%p171) target = $region32
    $region31: #{basic_conv2d.1} parent=5 // pred_region
      %s175 = ssub.s32 %s9, 1
      %s176 = smul.u32 32, %s18
      %p177 = scmp.lt.s32.totalorder %s176, 63
      %s178 = scalar_select %p177, %s176, 63
      %s179 = smul.addr %s178, 4
      %s180 = scalar_lea.vmem %s0, %s179
      %p181 = pneg %p47
      %p182 = pneg %p44
      %p183 = scmp.lt.s32.totalorder %s19, 0
      %s184 = scalar_select %p183, %s19, 0
      %s185 = smul.addr %s184, 4
      %s186 = scalar_lea.vmem %s1, %s185
      %p187 = pneg %p73
      %p188 = pneg %p70
      %p189 = scmp.lt.s32.totalorder %s19, 0
      %s190 = scalar_select %p189, %s19, 0
      %s191 = smul.addr %s190, 2
      %s192 = scalar_lea.vmem %s2, %s191
      %p193 = pneg %p99
      %p194 = pneg %p96
      %p195 = pneg %p127
      %p196 = pneg %p124
      %s197 = smul.u32 32, %s18
      %p198 = scmp.lt.s32.totalorder %s197, 63
      %s199 = scalar_select %p198, %s197, 63
      %p200 = scmp.lt.s32.totalorder %s19, 0
      %s201 = scalar_select %p200, %s19, 0
      %s202 = sadd.s32 %s201, %s199
      %s203 = smul.addr %s202, 8
      %s204 = scalar_lea.vmem %s3, %s203
      %s205 = smul.u32 32, %s18
      %p206 = scmp.lt.s32.totalorder %s205, 63
      %s207 = scalar_select %p206, %s205, 63
      %s208 = smul.addr %s207, 4
      %s209 = scalar_lea.vmem %s0, %s208
      %s210 = smul.u32 32, %s18
      %p211 = scmp.lt.s32.totalorder %s19, 0
      %s212 = scalar_select %p211, %s19, 0
      %s213 = smul.addr %s212, 4
      %s214 = scalar_lea.vmem %s1, %s213
      %p215 = scmp.lt.s32.totalorder %s19, 0
      %s216 = scalar_select %p215, %s19, 0
      %s217 = smul.addr %s216, 2
      %s218 = scalar_lea.vmem %s2, %s217
      %s219 = smul.u32 32, %s18
      %p220 = scmp.lt.s32.totalorder %s219, 63
      %s221 = scalar_select %p220, %s219, 63
      %p222 = scmp.lt.s32.totalorder %s19, 0
      %s223 = scalar_select %p222, %s19, 0
      %s224 = sadd.s32 %s223, %s221
      %s225 = smul.addr %s224, 8
      %s226 = scalar_lea.vmem %s3, %s225
      %s227 = smul.u32 32, %s18
      %v229 = vld [vmem:[%s209] sm:$0xf]
      %v230 = vld [vmem:[%s209 + $0x4] sm:$0xf]
      %v231 = vld [vmem:[%s209 + $0x8] sm:$0xf]
      %v232 = vld [vmem:[%s209 + $0xc] sm:$0xf]
      %v233 = vld [vmem:[%s209 + $0x10] sm:$0xf]
      %v234 = vld [vmem:[%s209 + $0x14] sm:$0xf]
      %v235 = vld [vmem:[%s209 + $0x18] sm:$0xf]
      %v236 = vld [vmem:[%s209 + $0x1c] sm:$0xf]
      %v237 = vld [vmem:[%s209 + $0x20] sm:$0xf]
      %v238 = vld [vmem:[%s209 + $0x24] sm:$0xf]
      %v239 = vld [vmem:[%s209 + $0x28] sm:$0xf]
      %v240 = vld [vmem:[%s209 + $0x2c] sm:$0xf]
      %v241 = vld [vmem:[%s209 + $0x30] sm:$0xf]
      %v242 = vld [vmem:[%s209 + $0x34] sm:$0xf]
      %v243 = vld [vmem:[%s209 + $0x38] sm:$0xf]
      %v244 = vld [vmem:[%s209 + $0x3c] sm:$0xf]
      %v245 = vld [vmem:[%s209 + $0x40] sm:$0xf]
      %v246 = vld [vmem:[%s209 + $0x44] sm:$0xf]
      %v247 = vld [vmem:[%s209 + $0x48] sm:$0xf]
      %v248 = vld [vmem:[%s209 + $0x4c] sm:$0xf]
      %v249 = vld [vmem:[%s209 + $0x50] sm:$0xf]
      %v250 = vld [vmem:[%s209 + $0x54] sm:$0xf]
      %v251 = vld [vmem:[%s209 + $0x58] sm:$0xf]
      %v252 = vld [vmem:[%s209 + $0x5c] sm:$0xf]
      %v253 = vld [vmem:[%s209 + $0x60] sm:$0xf]
      %v254 = vld [vmem:[%s209 + $0x64] sm:$0xf]
      %v255 = vld [vmem:[%s209 + $0x68] sm:$0xf]
      %v256 = vld [vmem:[%s209 + $0x6c] sm:$0xf]
      %v257 = vld [vmem:[%s209 + $0x70] sm:$0xf]
      %v258 = vld [vmem:[%s209 + $0x74] sm:$0xf]
      %v259 = vld [vmem:[%s209 + $0x78] sm:$0xf]
      %v260 = vld [vmem:[%s209 + $0x7c] sm:$0xf]
      %v261 = vld [vmem:[%s214] sm:$0xf]
      %v262 = vld [vmem:[%s214 + $0x4] sm:$0xf]
      %v263 = vld [vmem:[%s214 + $0x8] sm:$0xf]
      %v264 = vld [vmem:[%s214 + $0xc] sm:$0xf]
      %v265 = vld [vmem:[%s214 + $0x10] sm:$0xf]
      %v266 = vld [vmem:[%s214 + $0x14] sm:$0xf]
      %v299 = vunpack.c.l.b16 %v229
      %v300 = vunpack.c.l.b16 %v230
      %v301 = vunpack.c.l.b16 %v231
      %v302 = vunpack.c.l.b16 %v232
      %v303 = vunpack.c.l.b16 %v233
      %v304 = vunpack.c.l.b16 %v234
      %v305 = vunpack.c.l.b16 %v235
      %v306 = vunpack.c.l.b16 %v236
      %v307 = vunpack.c.l.b16 %v237
      %v308 = vunpack.c.l.b16 %v238
      %v309 = vunpack.c.l.b16 %v239
      %v310 = vunpack.c.l.b16 %v240
      %v311 = vunpack.c.l.b16 %v241
      %v312 = vunpack.c.l.b16 %v242
      %v313 = vunpack.c.l.b16 %v243
      %v314 = vunpack.c.l.b16 %v244
      %v315 = vunpack.c.l.b16 %v245
      %v316 = vunpack.c.l.b16 %v246
      %v317 = vunpack.c.l.b16 %v247
      %v318 = vunpack.c.l.b16 %v248
      %v319 = vunpack.c.l.b16 %v249
      %v320 = vunpack.c.l.b16 %v250
      %v321 = vunpack.c.l.b16 %v251
      %v322 = vunpack.c.l.b16 %v252
      %v323 = vunpack.c.l.b16 %v253
      %v324 = vunpack.c.l.b16 %v254
      %v325 = vunpack.c.l.b16 %v255
      %v326 = vunpack.c.l.b16 %v256
      %v327 = vunpack.c.l.b16 %v257
      %v328 = vunpack.c.l.b16 %v258
      %v329 = vunpack.c.l.b16 %v259
      %v330 = vunpack.c.l.b16 %v260
      %v331 = vpack.c.b16 %v300, %v299
      %v332 = vpack.c.b16 %v302, %v301
      %v333 = vpack.c.b16 %v304, %v303
      %v334 = vpack.c.b16 %v306, %v305
      %v335 = vpack.c.b16 %v308, %v307
      %v336 = vpack.c.b16 %v310, %v309
      %v337 = vpack.c.b16 %v312, %v311
      %v338 = vpack.c.b16 %v314, %v313
      %v339 = vpack.c.b16 %v316, %v315
      %v340 = vpack.c.b16 %v318, %v317
      %v341 = vpack.c.b16 %v320, %v319
      %v342 = vpack.c.b16 %v322, %v321
      %v343 = vpack.c.b16 %v324, %v323
      %v344 = vpack.c.b16 %v326, %v325
      %v345 = vpack.c.b16 %v328, %v327
      %v346 = vpack.c.b16 %v330, %v329
      %v353 = vunpack.c.l.b16 %v261
      %v354 = vunpack.c.l.b16 %v262
      %v355 = vunpack.c.l.b16 %v263
      %v356 = vunpack.c.l.b16 %v264
      %v357 = vunpack.c.l.b16 %v265
      %v358 = vunpack.c.l.b16 %v266
      %v359 = vpack.c.b16 %v354, %v353
      %v360 = vpack.c.b16 %v356, %v355
      %v361 = vpack.c.b16 %v358, %v357
      %vm365 = vcmask 392192
      %v367 = vsel %vm365, %v331, 0
      %v370 = vsel %vm365, %v332, 0
      %v373 = vsel %vm365, %v333, 0
      %v376 = vsel %vm365, %v334, 0
      %v379 = vsel %vm365, %v335, 0
      %v382 = vsel %vm365, %v336, 0
      %v385 = vsel %vm365, %v337, 0
      %v388 = vsel %vm365, %v338, 0
      %v391 = vsel %vm365, %v339, 0
      %v394 = vsel %vm365, %v340, 0
      %v397 = vsel %vm365, %v341, 0
      %v400 = vsel %vm365, %v342, 0
      %v403 = vsel %vm365, %v343, 0
      %v406 = vsel %vm365, %v344, 0
      %v409 = vsel %vm365, %v345, 0
      %v412 = vsel %vm365, %v346, 0
      %414 = vmatprep.subr.bf16.mxu0 0
      %415 = vmatpush1.bf16.msra.mxu0 %v359
      %416 = vmatprep.subr.bf16.mxu0 0
      %417 = vmatpush1.bf16.msra.mxu0 %v360
      %418 = vmatprep.subr.bf16.mxu0 0
      %419 = vmatpush1.bf16.msra.mxu0 %v361
      %420 = vmatprep.subr.bf16.mxu0 0
      %421 = vmatpush1.bf16.msra.mxu0 0
      %422 = vmatprep.subr.bf16.mxu0 0
      %423 = vmatpush1.bf16.msra.mxu0 0
      %424 = vmatprep.subr.bf16.mxu0 0
      %425 = vmatpush1.bf16.msra.mxu0 0
      %426 = vmatprep.subr.bf16.mxu0 0
      %427 = vmatpush1.bf16.msra.mxu0 0
      %428 = vmatprep.subr.bf16.mxu0 0
      %429 = vmatpush1.bf16.msra.mxu0 0
      %430 = vmatprep.subr.bf16.mxu0 0
      %431 = vmatpush1.bf16.msra.mxu0 0
      %432 = vmatprep.subr.bf16.mxu0 0
      %433 = vmatpush1.bf16.msra.mxu0 0
      %434 = vmatprep.subr.bf16.mxu0 0
      %435 = vmatpush1.bf16.msra.mxu0 0
      %436 = vmatprep.subr.bf16.mxu0 0
      %437 = vmatpush1.bf16.msra.mxu0 0
      %438 = vmatprep.subr.bf16.mxu0 0
      %439 = vmatpush1.bf16.msra.mxu0 0
      %440 = vmatprep.subr.bf16.mxu0 0
      %441 = vmatpush1.bf16.msra.mxu0 0
      %442 = vmatprep.subr.bf16.mxu0 0
      %443 = vmatpush1.bf16.msra.mxu0 0
      %444 = vmatprep.subr.bf16.mxu0 0
      %445 = vmatpush1.bf16.msra.mxu0 0
      %446 = vmatprep.mubr.bf16.mxu0 0
      %447 = vmatmul.mubr.bf16.gmra.mrb[0].mxu0 %v367
      %v448 = vpop.f32.mrb[0].mxu0
      %v449 = vadd.f32 0.0, %v448
      %v450 = vpop.f32.mrb[0].mxu0
      %v451 = vpop.f32.mrb[0].mxu0
      %v452 = vadd.f32 0.0, %v451
      %v453 = vpop.f32.mrb[0].mxu0
      %454 = vmatprep.mubr.bf16.mxu0 0
      %455 = vmatmul.mubr.bf16.gmra.mrb[0].mxu0 %v370
      %v456 = vpop.f32.mrb[0].mxu0
      %v457 = vadd.f32 0.0, %v456
      %v458 = vpop.f32.mrb[0].mxu0
      %v459 = vpop.f32.mrb[0].mxu0
      %v460 = vadd.f32 0.0, %v459
      %v461 = vpop.f32.mrb[0].mxu0
      %462 = vmatprep.mubr.bf16.mxu0 0
      %463 = vmatmul.mubr.bf16.gmra.mrb[0].mxu0 %v373
      %v464 = vpop.f32.mrb[0].mxu0
      %v465 = vadd.f32 0.0, %v464
      %v466 = vpop.f32.mrb[0].mxu0
      %v467 = vpop.f32.mrb[0].mxu0
      %v468 = vadd.f32 0.0, %v467
      %v469 = vpop.f32.mrb[0].mxu0
      %470 = vmatprep.mubr.bf16.mxu0 0
      %471 = vmatmul.mubr.bf16.gmra.mrb[0].mxu0 %v376
      %v472 = vpop.f32.mrb[0].mxu0
      %v473 = vadd.f32 0.0, %v472
      %v474 = vpop.f32.mrb[0].mxu0
      %v475 = vpop.f32.mrb[0].mxu0
      %v476 = vadd.f32 0.0, %v475
      %v477 = vpop.f32.mrb[0].mxu0
      %478 = vmatprep.mubr.bf16.mxu0 0
      %479 = vmatmul.mubr.bf16.gmra.mrb[0].mxu0 %v379
      %v480 = vpop.f32.mrb[0].mxu0
      %v481 = vadd.f32 0.0, %v480
      %v482 = vpop.f32.mrb[0].mxu0
      %v483 = vpop.f32.mrb[0].mxu0
      %v484 = vadd.f32 0.0, %v483
      %v485 = vpop.f32.mrb[0].mxu0
      %486 = vmatprep.mubr.bf16.mxu0 0
      %487 = vmatmul.mubr.bf16.gmra.mrb[0].mxu0 %v382
      %v488 = vpop.f32.mrb[0].mxu0
      %v489 = vadd.f32 0.0, %v488
      %v490 = vpop.f32.mrb[0].mxu0
      %v491 = vpop.f32.mrb[0].mxu0
      %v492 = vadd.f32 0.0, %v491
      %v493 = vpop.f32.mrb[0].mxu0
      %494 = vmatprep.mubr.bf16.mxu0 0
      %495 = vmatmul.mubr.bf16.gmra.mrb[0].mxu0 %v385
      %v496 = vpop.f32.mrb[0].mxu0
      %v497 = vadd.f32 0.0, %v496
      %v498 = vpop.f32.mrb[0].mxu0
      %v499 = vpop.f32.mrb[0].mxu0
      %v500 = vadd.f32 0.0, %v499
      %v501 = vpop.f32.mrb[0].mxu0
      %502 = vmatprep.mubr.bf16.mxu0 0
      %503 = vmatmul.mubr.bf16.gmra.mrb[0].mxu0 %v388
      %v504 = vpop.f32.mrb[0].mxu0
      %v505 = vadd.f32 0.0, %v504
      %v506 = vpop.f32.mrb[0].mxu0
      %v507 = vpop.f32.mrb[0].mxu0
      %v508 = vadd.f32 0.0, %v507
      %v509 = vpop.f32.mrb[0].mxu0
      %510 = vmatprep.mubr.bf16.mxu0 0
      %511 = vmatmul.mubr.bf16.gmra.mrb[0].mxu0 %v391
      %v512 = vpop.f32.mrb[0].mxu0
      %v513 = vadd.f32 0.0, %v512
      %v514 = vpop.f32.mrb[0].mxu0
      %v515 = vpop.f32.mrb[0].mxu0
      %v516 = vadd.f32 0.0, %v515
      %v517 = vpop.f32.mrb[0].mxu0
      %518 = vmatprep.mubr.bf16.mxu0 0
      %519 = vmatmul.mubr.bf16.gmra.mrb[0].mxu0 %v394
      %v520 = vpop.f32.mrb[0].mxu0
      %v521 = vadd.f32 0.0, %v520
      %v522 = vpop.f32.mrb[0].mxu0
      %v523 = vpop.f32.mrb[0].mxu0
      %v524 = vadd.f32 0.0, %v523
      %v525 = vpop.f32.mrb[0].mxu0
      %526 = vmatprep.mubr.bf16.mxu0 0
      %527 = vmatmul.mubr.bf16.gmra.mrb[0].mxu0 %v397
      %v528 = vpop.f32.mrb[0].mxu0
      %v529 = vadd.f32 0.0, %v528
      %v530 = vpop.f32.mrb[0].mxu0
      %v531 = vpop.f32.mrb[0].mxu0
      %v532 = vadd.f32 0.0, %v531
      %v533 = vpop.f32.mrb[0].mxu0
      %534 = vmatprep.mubr.bf16.mxu0 0
      %535 = vmatmul.mubr.bf16.gmra.mrb[0].mxu0 %v400
      %v536 = vpop.f32.mrb[0].mxu0
      %v537 = vadd.f32 0.0, %v536
      %v538 = vpop.f32.mrb[0].mxu0
      %v539 = vpop.f32.mrb[0].mxu0
      %v540 = vadd.f32 0.0, %v539
      %v541 = vpop.f32.mrb[0].mxu0
      %542 = vmatprep.mubr.bf16.mxu0 0
      %543 = vmatmul.mubr.bf16.gmra.mrb[0].mxu0 %v403
      %v544 = vpop.f32.mrb[0].mxu0
      %v545 = vadd.f32 0.0, %v544
      %v546 = vpop.f32.mrb[0].mxu0
      %v547 = vpop.f32.mrb[0].mxu0
      %v548 = vadd.f32 0.0, %v547
      %v549 = vpop.f32.mrb[0].mxu0
      %550 = vmatprep.mubr.bf16.mxu0 0
      %551 = vmatmul.mubr.bf16.gmra.mrb[0].mxu0 %v406
      %v552 = vpop.f32.mrb[0].mxu0
      %v553 = vadd.f32 0.0, %v552
      %v554 = vpop.f32.mrb[0].mxu0
      %v555 = vpop.f32.mrb[0].mxu0
      %v556 = vadd.f32 0.0, %v555
      %v557 = vpop.f32.mrb[0].mxu0
      %558 = vmatprep.mubr.bf16.mxu0 0
      %559 = vmatmul.mubr.bf16.gmra.mrb[0].mxu0 %v409
      %v560 = vpop.f32.mrb[0].mxu0
      %v561 = vadd.f32 0.0, %v560
      %v562 = vpop.f32.mrb[0].mxu0
      %v563 = vpop.f32.mrb[0].mxu0
      %v564 = vadd.f32 0.0, %v563
      %v565 = vpop.f32.mrb[0].mxu0
      %566 = vmatprep.mubr.bf16.mxu0 0
      %567 = vmatmul.mubr.bf16.gmra.mrb[0].mxu0 %v412
      %v568 = vpop.f32.mrb[0].mxu0
      %v569 = vadd.f32 0.0, %v568
      %v570 = vpop.f32.mrb[0].mxu0
      %v571 = vpop.f32.mrb[0].mxu0
      %v572 = vadd.f32 0.0, %v571
      %v573 = vpop.f32.mrb[0].mxu0
      %574 = vdwg.mxu0
      %v575 = vld [vmem:[%s218] sm:$0x1]
      %v576 = vlaneseq
      %v577 = vshrl.u32 %v576, 7
      %v578 = vsub.s32 0, %v577
      %v579 = vrot.slane %v575, %v578
      %v580 = vmul.f32 %v449, %v579
      %v581 = vmul.f32 %v452, %v579
      %v582 = vmul.f32 %v457, %v579
      %v583 = vmul.f32 %v460, %v579
      %v584 = vmul.f32 %v465, %v579
      %v585 = vmul.f32 %v468, %v579
      %v586 = vmul.f32 %v473, %v579
      %v587 = vmul.f32 %v476, %v579
      %v588 = vmul.f32 %v481, %v579
      %v589 = vmul.f32 %v484, %v579
      %v590 = vmul.f32 %v489, %v579
      %v591 = vmul.f32 %v492, %v579
      %v592 = vmul.f32 %v497, %v579
      %v593 = vmul.f32 %v500, %v579
      %v594 = vmul.f32 %v505, %v579
      %v595 = vmul.f32 %v508, %v579
      %v596 = vmul.f32 %v513, %v579
      %v597 = vmul.f32 %v516, %v579
      %v598 = vmul.f32 %v521, %v579
      %v599 = vmul.f32 %v524, %v579
      %v600 = vmul.f32 %v529, %v579
      %v601 = vmul.f32 %v532, %v579
      %v602 = vmul.f32 %v537, %v579
      %v603 = vmul.f32 %v540, %v579
      %v604 = vmul.f32 %v545, %v579
      %v605 = vmul.f32 %v548, %v579
      %v606 = vmul.f32 %v553, %v579
      %v607 = vmul.f32 %v556, %v579
      %v608 = vmul.f32 %v561, %v579
      %v609 = vmul.f32 %v564, %v579
      %v610 = vmul.f32 %v569, %v579
      %v611 = vmul.f32 %v572, %v579
      %v612 = vld [vmem:[%s218 + $0x1] sm:$0x1]
      %v613 = vlaneseq
      %v614 = vshrl.u32 %v613, 7
      %v615 = vsub.s32 0, %v614
      %v616 = vrot.slane %v612, %v615
      %v617 = vadd.f32 %v580, %v616
      %v618 = vadd.f32 %v581, %v616
      %v619 = vadd.f32 %v582, %v616
      %v620 = vadd.f32 %v583, %v616
      %v621 = vadd.f32 %v584, %v616
      %v622 = vadd.f32 %v585, %v616
      %v623 = vadd.f32 %v586, %v616
      %v624 = vadd.f32 %v587, %v616
      %v625 = vadd.f32 %v588, %v616
      %v626 = vadd.f32 %v589, %v616
      %v627 = vadd.f32 %v590, %v616
      %v628 = vadd.f32 %v591, %v616
      %v629 = vadd.f32 %v592, %v616
      %v630 = vadd.f32 %v593, %v616
      %v631 = vadd.f32 %v594, %v616
      %v632 = vadd.f32 %v595, %v616
      %v633 = vadd.f32 %v596, %v616
      %v634 = vadd.f32 %v597, %v616
      %v635 = vadd.f32 %v598, %v616
      %v636 = vadd.f32 %v599, %v616
      %v637 = vadd.f32 %v600, %v616
      %v638 = vadd.f32 %v601, %v616
      %v639 = vadd.f32 %v602, %v616
      %v640 = vadd.f32 %v603, %v616
      %v641 = vadd.f32 %v604, %v616
      %v642 = vadd.f32 %v605, %v616
      %v643 = vadd.f32 %v606, %v616
      %v644 = vadd.f32 %v607, %v616
      %v645 = vadd.f32 %v608, %v616
      %v646 = vadd.f32 %v609, %v616
      %v647 = vadd.f32 %v610, %v616
      %v648 = vadd.f32 %v611, %v616
      %v649 = vmax.f32 %v617, 0.0
      %v650 = vmax.f32 %v618, 0.0
      %v651 = vmax.f32 %v619, 0.0
      %v652 = vmax.f32 %v620, 0.0
      %v653 = vmax.f32 %v621, 0.0
      %v654 = vmax.f32 %v622, 0.0
      %v655 = vmax.f32 %v623, 0.0
      %v656 = vmax.f32 %v624, 0.0
      %v657 = vmax.f32 %v625, 0.0
      %v658 = vmax.f32 %v626, 0.0
      %v659 = vmax.f32 %v627, 0.0
      %v660 = vmax.f32 %v628, 0.0
      %v661 = vmax.f32 %v629, 0.0
      %v662 = vmax.f32 %v630, 0.0
      %v663 = vmax.f32 %v631, 0.0
      %v664 = vmax.f32 %v632, 0.0
      %v665 = vmax.f32 %v633, 0.0
      %v666 = vmax.f32 %v634, 0.0
      %v667 = vmax.f32 %v635, 0.0
      %v668 = vmax.f32 %v636, 0.0
      %v669 = vmax.f32 %v637, 0.0
      %v670 = vmax.f32 %v638, 0.0
      %v671 = vmax.f32 %v639, 0.0
      %v672 = vmax.f32 %v640, 0.0
      %v673 = vmax.f32 %v641, 0.0
      %v674 = vmax.f32 %v642, 0.0
      %v675 = vmax.f32 %v643, 0.0
      %v676 = vmax.f32 %v644, 0.0
      %v677 = vmax.f32 %v645, 0.0
      %v678 = vmax.f32 %v646, 0.0
      %v679 = vmax.f32 %v647, 0.0
      %v680 = vmax.f32 %v648, 0.0
      %681 = vst [vmem:[%s226] sm:$0xff] %v649
      %682 = vst [vmem:[%s226 + $0x8] sm:$0xff] %v650
      %683 = vst [vmem:[%s226 + $0x10] sm:$0xff] %v651
      %684 = vst [vmem:[%s226 + $0x18] sm:$0xff] %v652
      %685 = vst [vmem:[%s226 + $0x20] sm:$0xff] %v653
      %686 = vst [vmem:[%s226 + $0x28] sm:$0xff] %v654
      %687 = vst [vmem:[%s226 + $0x30] sm:$0xff] %v655
      %688 = vst [vmem:[%s226 + $0x38] sm:$0xff] %v656
      %689 = vst [vmem:[%s226 + $0x40] sm:$0xff] %v657
      %690 = vst [vmem:[%s226 + $0x48] sm:$0xff] %v658
      %691 = vst [vmem:[%s226 + $0x50] sm:$0xff] %v659
      %692 = vst [vmem:[%s226 + $0x58] sm:$0xff] %v660
      %693 = vst [vmem:[%s226 + $0x60] sm:$0xff] %v661
      %694 = vst [vmem:[%s226 + $0x68] sm:$0xff] %v662
      %695 = vst [vmem:[%s226 + $0x70] sm:$0xff] %v663
      %696 = vst [vmem:[%s226 + $0x78] sm:$0xff] %v664
      %697 = vst [vmem:[%s226 + $0x80] sm:$0xff] %v665
      %698 = vst [vmem:[%s226 + $0x88] sm:$0xff] %v666
      %699 = vst [vmem:[%s226 + $0x90] sm:$0xff] %v667
      %700 = vst [vmem:[%s226 + $0x98] sm:$0xff] %v668
      %701 = vst [vmem:[%s226 + $0xa0] sm:$0xff] %v669
      %702 = vst [vmem:[%s226 + $0xa8] sm:$0xff] %v670
      %703 = vst [vmem:[%s226 + $0xb0] sm:$0xff] %v671
      %704 = vst [vmem:[%s226 + $0xb8] sm:$0xff] %v672
      %705 = vst [vmem:[%s226 + $0xc0] sm:$0xff] %v673
      %706 = vst [vmem:[%s226 + $0xc8] sm:$0xff] %v674
      %707 = vst [vmem:[%s226 + $0xd0] sm:$0xff] %v675
      %708 = vst [vmem:[%s226 + $0xd8] sm:$0xff] %v676
      %709 = vst [vmem:[%s226 + $0xe0] sm:$0xff] %v677
      %710 = vst [vmem:[%s226 + $0xe8] sm:$0xff] %v678
      %711 = vst [vmem:[%s226 + $0xf0] sm:$0xff] %v679
      %712 = vst [vmem:[%s226 + $0xf8] sm:$0xff] %v680
      %s713 = smul.u32 32, %s18
      %p714 = scmp.lt.s32.totalorder %s713, 63
      %s715 = scalar_select %p714, %s713, 63
      %p716 = scmp.lt.s32.totalorder %s19, 0
      %s717 = scalar_select %p716, %s19, 0
      %s718 = sadd.s32 %s717, %s715
      %s719 = smul.addr %s718, 8
      %s720 = scalar_lea.vmem %s3, %s719
      // Predicated region
      $region33: #{basic_conv2d.1} parent=31 // pred_check
        %p721 = pneg %p124
      $region34: #{basic_conv2d.1} parent=31 // pred_check_branch
        %723 = sbr.rel (%p721) target = $region36
      $region35: #{basic_conv2d.1} parent=31 // pred_region
        %s724 = smul.u32 32, %s18
      $region36: #{basic_conv2d.1} parent=31 // pred_fallthru
        _
    $region32: #{basic_conv2d.1} parent=5 // pred_fallthru
      _
    %p725 = scmp.le.s32.totalorder 2, %s9
    // Predicated region
    $region37: #{basic_conv2d.1} parent=5 // pred_check
      %p726 = pneg %p725
    $region38: #{basic_conv2d.1} parent=5 // pred_check_branch
      %728 = sbr.rel (%p726) target = $region40
    $region39: #{basic_conv2d.1} parent=5 // pred_region
      %s729 = ssub.s32 %s9, 2
      // Predicated region
      $region41: #{basic_conv2d.1} parent=39 // pred_check
        %p730 = pneg %p130
      $region42: #{basic_conv2d.1} parent=39 // pred_check_branch
        %732 = sbr.rel (%p730) target = $region44
      $region43: #{basic_conv2d.1} parent=39 // pred_region
        %s733 = smul.u32 32, %s20
        %p734 = scmp.lt.s32.totalorder %s733, 63
        %s735 = scalar_select %p734, %s733, 63
        %p736 = scmp.lt.s32.totalorder %s21, 0
        %s737 = scalar_select %p736, %s21, 0
        %s738 = sadd.s32 %s737, %s735
        %s739 = smul.addr %s738, 8
        %s740 = scalar_lea.vmem %s3, %s739
      $region44: #{basic_conv2d.1} parent=39 // pred_fallthru
        _
    $region40: #{basic_conv2d.1} parent=5 // pred_fallthru
      _
  $region6: #{basic_conv2d.1} parent=0 // loop_footer
    %s13 = sadd.s32 1, %s9
  $region7: #{basic_conv2d.1} parent=0 // loop_footer_branch
    %8 = sbr.rel target = $region3
  $region8: #{basic_conv2d.1} parent=0 // loop_exit
    _

</llo_original>
